<compile_context>
chip_gen: v5e
topology: v5e:2x2
jax: 0.10.0
libtpu: 0.0.40
codegen_flags: <defaults>
</compile_context>

<pallas_src>
import functools
import math

import jax
import jax.numpy as jnp
from jax.experimental import pallas as pl
from jax.experimental.pallas import tpu as pltpu


def _self_attention_kernel(gamma_ref, wq_ref, bq_ref, wk_ref, bk_ref,
                           wv_ref, bv_ref, xf_ref, xt_ref, o_ref,
                           k_s, v_s, *, n_valid):
    qi = pl.program_id(1)

    # Per-batch K / V projection, cached in bf16 VMEM scratch across query tiles.
    @pl.when(qi == 0)
    def _():
        xb = xf_ref[0].astype(jnp.bfloat16)                              # (C, Npad)
        k = jnp.dot(wk_ref[...], xb,
                    preferred_element_type=jnp.float32) + bk_ref[...]    # (Cr, Npad)
        k_s[...] = k.astype(jnp.bfloat16)
        v = jnp.dot(wv_ref[...], xb,
                    preferred_element_type=jnp.float32) + bv_ref[...]    # (C, Npad)
        v_s[...] = v.astype(jnp.bfloat16)

    # Per-tile Q projection (1/sqrt(d) already folded into wq/bq in the wrapper).
    x_t = xt_ref[0]                                                      # (C, tq) f32
    q_t = jnp.dot(wq_ref[...], x_t.astype(jnp.bfloat16),
                  preferred_element_type=jnp.float32) + bq_ref[...]      # (Cr, tq)
    q_t = q_t.astype(jnp.bfloat16)

    # energy[m, n] = sum_r q[r, m] * k[r, n]  -> (tq, Npad); no explicit transpose.
    energy = jax.lax.dot_general(q_t, k_s[...], (((0,), (0,)), ((), ())),
                                 preferred_element_type=jnp.float32)

    n_pad = k_s.shape[1]
    if n_valid != n_pad:
        col = jax.lax.broadcasted_iota(jnp.int32, energy.shape, 1)
        energy = jnp.where(col < n_valid, energy, -1e30)

    # Row softmax in f32 (full key axis present -> no online-softmax carry needed).
    m = jnp.max(energy, axis=-1, keepdims=True)
    p = jnp.exp(energy - m)
    attn = (p * pl.reciprocal(jnp.sum(p, axis=-1, keepdims=True),
                              approx=True)).astype(jnp.bfloat16)         # (tq, Npad)

    # out[c, m] = sum_n v[c, n] * attn[m, n]  -> (C, tq); no explicit transpose.
    out = jax.lax.dot_general(v_s[...], attn, (((1,), (1,)), ((), ())),
                              preferred_element_type=jnp.float32)

    o_ref[0] = (gamma_ref[0] * out + x_t).astype(o_ref.dtype)


def self_attention(x_nchw, params, *, tq=None):
    """x_nchw: (B, C, W, H) float32.  params: dict of weights (see make_params)."""
    B, C, W, H = x_nchw.shape
    N = W * H
    Cr = params["wq"].shape[0]
    inv_d = 1.0 / math.sqrt(float(Cr))

    # Query-tile size: multiple of 128, modest enough for v7x's 64 MiB VMEM.
    if tq is None:
        tq = 128 if N <= 1024 else 256
    n_pad = ((N + tq - 1) // tq) * tq
    n_tiles = n_pad // tq

    x_flat = x_nchw.reshape(B, C, N)
    if n_pad != N:
        x_flat = jnp.pad(x_flat, ((0, 0), (0, 0), (0, n_pad - N)))

    # Fold the 1/sqrt(d) scale into the query weights/bias; bf16 MXU operands.
    wq = (params["wq"] * inv_d).astype(jnp.bfloat16)
    bq = (params["bq"] * inv_d).astype(jnp.float32)
    wk = params["wk"].astype(jnp.bfloat16)
    bk = params["bk"].astype(jnp.float32)
    wv = params["wv"].astype(jnp.bfloat16)
    bv = params["bv"].astype(jnp.float32)
    gamma = params["gamma"].reshape(-1)[:1].astype(jnp.float32)   # (1,) -> SMEM

    kernel = functools.partial(_self_attention_kernel, n_valid=N)

    out_flat = pl.pallas_call(
        kernel,
        out_shape=jax.ShapeDtypeStruct((B, C, n_pad), x_nchw.dtype),
        grid_spec=pltpu.PrefetchScalarGridSpec(
            num_scalar_prefetch=0,
            grid=(B, n_tiles),
            in_specs=[
                pl.BlockSpec(memory_space=pltpu.MemorySpace.SMEM),        # gamma
                pl.BlockSpec((Cr, C), lambda b, qi: (0, 0)),              # wq (scaled)
                pl.BlockSpec((Cr, 1), lambda b, qi: (0, 0)),              # bq (scaled)
                pl.BlockSpec((Cr, C), lambda b, qi: (0, 0)),              # wk
                pl.BlockSpec((Cr, 1), lambda b, qi: (0, 0)),              # bk
                pl.BlockSpec((C, C), lambda b, qi: (0, 0)),               # wv
                pl.BlockSpec((C, 1), lambda b, qi: (0, 0)),               # bv
                pl.BlockSpec((1, C, n_pad), lambda b, qi: (b, 0, 0)),     # x full slab (K/V)
                pl.BlockSpec((1, C, tq), lambda b, qi: (b, 0, qi)),       # x query tile (Q + residual)
            ],
            out_specs=pl.BlockSpec((1, C, tq), lambda b, qi: (b, 0, qi)),
            scratch_shapes=[
                pltpu.VMEM((Cr, n_pad), jnp.bfloat16),   # K cache (per batch)
                pltpu.VMEM((C, n_pad), jnp.bfloat16),    # V cache (per batch)
            ],
        ),
        compiler_params=pltpu.CompilerParams(
            # Query-tile axis must be "arbitrary": K/V scratch computed at qi==0
            # is reused by later query tiles of the same batch.
            dimension_semantics=("parallel", "arbitrary"),
            vmem_limit_bytes=48 * 1024 * 1024,
        ),
    )(gamma, wq, bq, wk, bk, wv, bv, x_flat, x_flat)

    return out_flat[:, :, :N].reshape(B, C, W, H)


def _reference(x_nchw, params):
    """Pure-JAX f32 reference mirroring the PyTorch forward (mode='self')."""
    B, C, W, H = x_nchw.shape
    N = W * H
    Cr = params["wq"].shape[0]
    D = math.sqrt(float(Cr))
    x = x_nchw.reshape(B, C, N)
    q = jnp.einsum("rc,bcn->brn", params["wq"], x) + params["bq"][None]      # (B, Cr, N)
    k = jnp.einsum("rc,bcn->brn", params["wk"], x) + params["bk"][None]
    v = jnp.einsum("oc,bcn->bon", params["wv"], x) + params["bv"][None]
    energy = jnp.einsum("brm,brn->bmn", q, k) / D                            # (B, N, N)
    attn = jax.nn.softmax(energy, axis=-1)
    out = jnp.einsum("bcn,bmn->bcm", v, attn)                                # (B, C, N)
    out = params["gamma"][0] * out + x
    return out.reshape(B, C, W, H)


def make_params(key, in_dim, reduction=8):
    c_red = max(1, in_dim // reduction)
    ks = jax.random.split(key, 6)
    scale = 1.0 / math.sqrt(in_dim)
    params = {
        "wq": jax.random.uniform(ks[0], (c_red, in_dim), jnp.float32, -scale, scale),
        "bq": jax.random.uniform(ks[1], (c_red, 1), jnp.float32, -scale, scale),
        "wk": jax.random.uniform(ks[2], (c_red, in_dim), jnp.float32, -scale, scale),
        "bk": jax.random.uniform(ks[3], (c_red, 1), jnp.float32, -scale, scale),
        "wv": jax.random.uniform(ks[4], (in_dim, in_dim), jnp.float32, -scale, scale),
        "bv": jax.random.uniform(ks[5], (in_dim, 1), jnp.float32, -scale, scale),
        # nn.Parameter(torch.zeros(1)) in the module; nonzero here so the
        # attention path actually contributes to the output in the test.
        "gamma": jnp.full((1,), 0.5, jnp.float32),
    }
    return params


if __name__ == "__main__":
    # in_dim=64 -> reduced dim Cr=8, N = 16*16 = 256 (lane-dense, 2 query tiles).
    B, C, W, H = 2, 64, 16, 16
    key = jax.random.PRNGKey(0)
    kx, kp = jax.random.split(key)
    x = jax.random.normal(kx, (B, C, W, H), jnp.float32)
    params = make_params(kp, C)

    out = self_attention(x, params)
    out = jax.block_until_ready(out)

    ref = _reference(x, params)
    assert out.shape == (B, C, W, H)
    # bf16 MXU operands (f32 accumulation) -> loosen tolerance vs the f32 reference.
    assert jnp.allclose(out, ref, atol=2e-2, rtol=2e-2), (
        float(jnp.max(jnp.abs(out - ref))))

    print("KERNEL_OK")
</pallas_src>

<mosaic_0001>
module attributes {stable_mosaic.version = 11 : i64} {
  func.func @_self_attention_kernel(%arg0: i32, %arg1: i32, %arg2: memref<1xf32, #tpu.memory_space<smem>>, %arg3: memref<8x64xbf16, #tpu.memory_space<vmem>>, %arg4: memref<8x1xf32, #tpu.memory_space<vmem>>, %arg5: memref<8x64xbf16, #tpu.memory_space<vmem>>, %arg6: memref<8x1xf32, #tpu.memory_space<vmem>>, %arg7: memref<64x64xbf16, #tpu.memory_space<vmem>>, %arg8: memref<64x1xf32, #tpu.memory_space<vmem>>, %arg9: memref<1x64x256xf32, #tpu.memory_space<vmem>>, %arg10: memref<1x64x128xf32, #tpu.memory_space<vmem>>, %arg11: memref<1x64x128xf32, #tpu.memory_space<vmem>>, %arg12: memref<8x256xbf16, #tpu.memory_space<vmem>>, %arg13: memref<64x256xbf16, #tpu.memory_space<vmem>>) attributes {dimension_semantics = [#tpu.dimension_semantics<parallel>, #tpu.dimension_semantics<arbitrary>], iteration_bounds = array<i64: 2, 2>, scalar_prefetch = 0 : i64, scratch_operands = 2 : i64, tpu.core_type = #tpu.core_type<tc>, window_params = [{transform_indices = @transform_0, window_bounds = array<i64: 1>}, {pipeline_mode = #tpu.pipeline_mode<synchronous>, transform_indices = @transform_1, window_bounds = array<i64: 8, 64>}, {pipeline_mode = #tpu.pipeline_mode<synchronous>, transform_indices = @transform_2, window_bounds = array<i64: 8, 1>}, {pipeline_mode = #tpu.pipeline_mode<synchronous>, transform_indices = @transform_3, window_bounds = array<i64: 8, 64>}, {pipeline_mode = #tpu.pipeline_mode<synchronous>, transform_indices = @transform_4, window_bounds = array<i64: 8, 1>}, {pipeline_mode = #tpu.pipeline_mode<synchronous>, transform_indices = @transform_5, window_bounds = array<i64: 64, 64>}, {pipeline_mode = #tpu.pipeline_mode<synchronous>, transform_indices = @transform_6, window_bounds = array<i64: 64, 1>}, {transform_indices = @transform_7, window_bounds = array<i64: 1, 64, 256>}, {transform_indices = @transform_8, window_bounds = array<i64: 1, 64, 128>}, {transform_indices = @transform_9, window_bounds = array<i64: 1, 64, 128>}]} {
    %c0_i32 = arith.constant 0 : i32
    %0 = arith.cmpi eq, %arg1, %c0_i32 : i32
    %1 = arith.extui %0 : i1 to i32
    %c0_i32_0 = arith.constant 0 : i32
    %2 = arith.cmpi ne, %1, %c0_i32_0 : i32
    scf.if %2 {
      %c0_19 = arith.constant 0 : index
      %c0_20 = arith.constant 0 : index
      %c0_21 = arith.constant 0 : index
      %34 = vector.load %arg9[%c0_19, %c0_20, %c0_21] : memref<1x64x256xf32, #tpu.memory_space<vmem>>, vector<1x64x256xf32>
      %35 = vector.shape_cast %34 : vector<1x64x256xf32> to vector<64x256xf32>
      %36 = arith.truncf %35 : vector<64x256xf32> to vector<64x256xbf16>
      %c0_22 = arith.constant 0 : index
      %c0_23 = arith.constant 0 : index
      %37 = vector.load %arg5[%c0_22, %c0_23] : memref<8x64xbf16, #tpu.memory_space<vmem>>, vector<8x64xbf16>
      %cst_24 = arith.constant dense<0.000000e+00> : vector<8x256xf32>
      %38 = tpu.matmul %37, %36, %cst_24 {dimension_numbers = #tpu.dot_dimension_numbers<[1], [0], [0], [1], [0, 0, 1, 1], [], []>} : vector<8x64xbf16>, vector<64x256xbf16>, vector<8x256xf32> -> vector<8x256xf32>
      %c0_25 = arith.constant 0 : index
      %c0_26 = arith.constant 0 : index
      %39 = vector.load %arg6[%c0_25, %c0_26] : memref<8x1xf32, #tpu.memory_space<vmem>>, vector<8x1xf32>
      %40 = vector.broadcast %39 : vector<8x1xf32> to vector<8x256xf32>
      %41 = arith.addf %38, %40 : vector<8x256xf32>
      %42 = arith.truncf %41 : vector<8x256xf32> to vector<8x256xbf16>
      %c0_27 = arith.constant 0 : index
      %c0_28 = arith.constant 0 : index
      %43 = vector.load %arg12[%c0_27, %c0_28] : memref<8x256xbf16, #tpu.memory_space<vmem>>, vector<8x256xbf16>
      tpu.vector_store %arg12[%c0_27, %c0_28], %42 {strides = array<i32>} : memref<8x256xbf16, #tpu.memory_space<vmem>>, vector<8x256xbf16>,
      %c0_29 = arith.constant 0 : index
      %c0_30 = arith.constant 0 : index
      %44 = vector.load %arg7[%c0_29, %c0_30] : memref<64x64xbf16, #tpu.memory_space<vmem>>, vector<64x64xbf16>
      %cst_31 = arith.constant dense<0.000000e+00> : vector<64x256xf32>
      %45 = tpu.matmul %44, %36, %cst_31 {dimension_numbers = #tpu.dot_dimension_numbers<[1], [0], [0], [1], [0, 0, 1, 1], [], []>} : vector<64x64xbf16>, vector<64x256xbf16>, vector<64x256xf32> -> vector<64x256xf32>
      %c0_32 = arith.constant 0 : index
      %c0_33 = arith.constant 0 : index
      %46 = vector.load %arg8[%c0_32, %c0_33] : memref<64x1xf32, #tpu.memory_space<vmem>>, vector<64x1xf32>
      %47 = vector.broadcast %46 : vector<64x1xf32> to vector<64x256xf32>
      %48 = arith.addf %45, %47 : vector<64x256xf32>
      %49 = arith.truncf %48 : vector<64x256xf32> to vector<64x256xbf16>
      %c0_34 = arith.constant 0 : index
      %c0_35 = arith.constant 0 : index
      %50 = vector.load %arg13[%c0_34, %c0_35] : memref<64x256xbf16, #tpu.memory_space<vmem>>, vector<64x256xbf16>
      tpu.vector_store %arg13[%c0_34, %c0_35], %49 {strides = array<i32>} : memref<64x256xbf16, #tpu.memory_space<vmem>>, vector<64x256xbf16>,
    } else {
    }
    %c0 = arith.constant 0 : index
    %c0_1 = arith.constant 0 : index
    %c0_2 = arith.constant 0 : index
    %3 = vector.load %arg10[%c0, %c0_1, %c0_2] : memref<1x64x128xf32, #tpu.memory_space<vmem>>, vector<1x64x128xf32>
    %4 = vector.shape_cast %3 : vector<1x64x128xf32> to vector<64x128xf32>
    %c0_3 = arith.constant 0 : index
    %c0_4 = arith.constant 0 : index
    %5 = vector.load %arg3[%c0_3, %c0_4] : memref<8x64xbf16, #tpu.memory_space<vmem>>, vector<8x64xbf16>
    %6 = arith.truncf %4 : vector<64x128xf32> to vector<64x128xbf16>
    %cst = arith.constant dense<0.000000e+00> : vector<8x128xf32>
    %7 = tpu.matmul %5, %6, %cst {dimension_numbers = #tpu.dot_dimension_numbers<[1], [0], [0], [1], [0, 0, 1, 1], [], []>} : vector<8x64xbf16>, vector<64x128xbf16>, vector<8x128xf32> -> vector<8x128xf32>
    %c0_5 = arith.constant 0 : index
    %c0_6 = arith.constant 0 : index
    %8 = vector.load %arg4[%c0_5, %c0_6] : memref<8x1xf32, #tpu.memory_space<vmem>>, vector<8x1xf32>
    %9 = vector.broadcast %8 : vector<8x1xf32> to vector<8x128xf32>
    %10 = arith.addf %7, %9 : vector<8x128xf32>
    %11 = arith.truncf %10 : vector<8x128xf32> to vector<8x128xbf16>
    %c0_7 = arith.constant 0 : index
    %c0_8 = arith.constant 0 : index
    %12 = vector.load %arg12[%c0_7, %c0_8] : memref<8x256xbf16, #tpu.memory_space<vmem>>, vector<8x256xbf16>
    %cst_9 = arith.constant dense<0.000000e+00> : vector<128x256xf32>
    %13 = tpu.matmul %11, %12, %cst_9 {dimension_numbers = #tpu.dot_dimension_numbers<[0], [0], [1], [1], [0, 1, 1, 1], [], []>} : vector<8x128xbf16>, vector<8x256xbf16>, vector<128x256xf32> -> vector<128x256xf32>
    %cst_10 = arith.constant dense<0xFF800000> : vector<128xf32>
    %14 = vector.multi_reduction <maximumf>, %13, %cst_10 [1] : vector<128x256xf32> to vector<128xf32>
    %15 = vector.shape_cast %14 : vector<128xf32> to vector<128x1xf32>
    %16 = vector.broadcast %15 : vector<128x1xf32> to vector<128x256xf32>
    %17 = arith.subf %13, %16 : vector<128x256xf32>
    %18 = math.exp %17 : vector<128x256xf32>
    %cst_11 = arith.constant dense<0.000000e+00> : vector<128xf32>
    %19 = vector.multi_reduction <add>, %18, %cst_11 [1] : vector<128x256xf32> to vector<128xf32>
    %20 = vector.shape_cast %19 : vector<128xf32> to vector<128x1xf32>
    %21 = tpu.reciprocal %20 {approx = true} : vector<128x1xf32> -> vector<128x1xf32>
    %22 = vector.broadcast %21 : vector<128x1xf32> to vector<128x256xf32>
    %23 = arith.mulf %18, %22 : vector<128x256xf32>
    %24 = arith.truncf %23 : vector<128x256xf32> to vector<128x256xbf16>
    %c0_12 = arith.constant 0 : index
    %c0_13 = arith.constant 0 : index
    %25 = vector.load %arg13[%c0_12, %c0_13] : memref<64x256xbf16, #tpu.memory_space<vmem>>, vector<64x256xbf16>
    %cst_14 = arith.constant dense<0.000000e+00> : vector<64x128xf32>
    %26 = tpu.matmul %25, %24, %cst_14 {dimension_numbers = #tpu.dot_dimension_numbers<[1], [1], [0], [0], [0, 0, 1, 0], [], []>} : vector<64x256xbf16>, vector<128x256xbf16>, vector<64x128xf32> -> vector<64x128xf32>
    %c0_15 = arith.constant 0 : index
    %27 = memref.load %arg2[%c0_15] : memref<1xf32, #tpu.memory_space<smem>>
    %28 = vector.broadcast %27 : f32 to vector<64x128xf32>
    %29 = arith.mulf %28, %26 : vector<64x128xf32>
    %30 = arith.addf %29, %4 : vector<64x128xf32>
    %c0_16 = arith.constant 0 : index
    %c0_17 = arith.constant 0 : index
    %c0_18 = arith.constant 0 : index
    %31 = vector.load %arg11[%c0_16, %c0_17, %c0_18] : memref<1x64x128xf32, #tpu.memory_space<vmem>>, vector<1x64x128xf32>
    %32 = vector.shape_cast %31 : vector<1x64x128xf32> to vector<64x128xf32>
    %33 = vector.shape_cast %30 : vector<64x128xf32> to vector<1x64x128xf32>
    tpu.vector_store %arg11[%c0_16, %c0_17, %c0_18], %33 {strides = array<i32>} : memref<1x64x128xf32, #tpu.memory_space<vmem>>, vector<1x64x128xf32>,
    return
  }
  func.func @transform_0(%arg0: i32, %arg1: i32) -> i32 {
    %c0_i32 = arith.constant 0 : i32
    %c0_i32_0 = arith.constant 0 : i32
    return %c0_i32 : i32
  }
  func.func @transform_1(%arg0: i32, %arg1: i32) -> (i32, i32) {
    %c0_i32 = arith.constant 0 : i32
    %c0_i32_0 = arith.constant 0 : i32
    %c0_i32_1 = arith.constant 0 : i32
    return %c0_i32, %c0_i32_0 : i32, i32
  }
  func.func @transform_2(%arg0: i32, %arg1: i32) -> (i32, i32) {
    %c0_i32 = arith.constant 0 : i32
    %c0_i32_0 = arith.constant 0 : i32
    %c0_i32_1 = arith.constant 0 : i32
    return %c0_i32, %c0_i32_0 : i32, i32
  }
  func.func @transform_3(%arg0: i32, %arg1: i32) -> (i32, i32) {
    %c0_i32 = arith.constant 0 : i32
    %c0_i32_0 = arith.constant 0 : i32
    %c0_i32_1 = arith.constant 0 : i32
    return %c0_i32, %c0_i32_0 : i32, i32
  }
  func.func @transform_4(%arg0: i32, %arg1: i32) -> (i32, i32) {
    %c0_i32 = arith.constant 0 : i32
    %c0_i32_0 = arith.constant 0 : i32
    %c0_i32_1 = arith.constant 0 : i32
    return %c0_i32, %c0_i32_0 : i32, i32
  }
  func.func @transform_5(%arg0: i32, %arg1: i32) -> (i32, i32) {
    %c0_i32 = arith.constant 0 : i32
    %c0_i32_0 = arith.constant 0 : i32
    %c0_i32_1 = arith.constant 0 : i32
    return %c0_i32, %c0_i32_0 : i32, i32
  }
  func.func @transform_6(%arg0: i32, %arg1: i32) -> (i32, i32) {
    %c0_i32 = arith.constant 0 : i32
    %c0_i32_0 = arith.constant 0 : i32
    %c0_i32_1 = arith.constant 0 : i32
    return %c0_i32, %c0_i32_0 : i32, i32
  }
  func.func @transform_7(%arg0: i32, %arg1: i32) -> (i32, i32, i32) {
    %c0_i32 = arith.constant 0 : i32
    %c0_i32_0 = arith.constant 0 : i32
    %c0_i32_1 = arith.constant 0 : i32
    return %arg0, %c0_i32, %c0_i32_0 : i32, i32, i32
  }
  func.func @transform_8(%arg0: i32, %arg1: i32) -> (i32, i32, i32) {
    %c0_i32 = arith.constant 0 : i32
    %c0_i32_0 = arith.constant 0 : i32
    return %arg0, %c0_i32, %arg1 : i32, i32, i32
  }
  func.func @transform_9(%arg0: i32, %arg1: i32) -> (i32, i32, i32) {
    %c0_i32 = arith.constant 0 : i32
    %c0_i32_0 = arith.constant 0 : i32
    return %arg0, %c0_i32, %arg1 : i32, i32, i32
  }
}

</mosaic_0001>

<llo_original>
// kernel: tpu_custom_call.1
$region0: #{tpu_custom_call.1}
  #allocation0 [shape = 'u32[]', space=smem, size = 0x4, offset = 0x4, fixed_abs, tag = 'smem constant byte address 0x4 - core index']
  #allocation1 [shape = 'u32[72,128]{1,0:T(1,128)}', space=vmem, size = 0x9000, scoped, tag = 'internal scratch']
  #allocation2 [shape = 'bf16[8,256]{1,0:T(8,128)(2,1)}', space=vmem, size = 0x1000, scoped, tag = 'scratch operand']
  #allocation3 [shape = 'bf16[64,256]{1,0:T(8,128)(2,1)}', space=vmem, size = 0x8000, scoped, tag = 'scratch operand']
  #allocation4 [shape = 'f32[1]{0:T(128)S(6)}', space=smem, size = 0x200, scoped, tag = 'scoped memory for tpu_custom_call.1']
  %s0 = inlined_call_operand.<no memory space> [shape: f32[1], index: 0, kind: input, shape index: {}]
  %s1 = inlined_call_operand.vmem [shape: bf16[8,64], index: 1, kind: input, shape index: {}]
  %s2 = inlined_call_operand.vmem [shape: f32[8,1], index: 2, kind: input, shape index: {}]
  %s3 = inlined_call_operand.vmem [shape: bf16[8,64], index: 3, kind: input, shape index: {}]
  %s4 = inlined_call_operand.vmem [shape: f32[8,1], index: 4, kind: input, shape index: {}]
  %s5 = inlined_call_operand.vmem [shape: bf16[64,64], index: 5, kind: input, shape index: {}]
  %s6 = inlined_call_operand.vmem [shape: f32[64,1], index: 6, kind: input, shape index: {}]
  %s7 = inlined_call_operand.hbm [shape: f32[2,64,256], index: 7, kind: input, shape index: {}]
  %s8 = inlined_call_operand.hbm [shape: f32[2,64,256], index: 8, kind: input, shape index: {}]
  %s9 = inlined_call_operand.hbm [shape: f32[2,64,256], index: 9, kind: output, shape index: {}]
  %s10 = sld [smem:[#allocation0]]
  $region81: #{tpu_custom_call.1} parent=0
    _
  %s12 = ssub.s32 1, %s10
  %s13 = scalar_select 0, %s12, %s10
  %14 = sst [smem:[#allocation4]] %s0
  $region1: #{tpu_custom_call.1} parent=0
    #allocation5 [shape = 'u8[131072]{0}', space=vmem, size = 0x20000, scoped, tag = 'input window, operand 7']
    #allocation6 [shape = 's32[2]{0}', space=sflag, size = 0x8, scoped, tag = 'scoped memory for tpu_custom_call.1']
    #allocation7 [shape = 's32[2]{0}', space=sflag, size = 0x8, scoped, tag = 'scoped memory for tpu_custom_call.1']
    #allocation8 [shape = 'u8[65536]{0}', space=vmem, size = 0x10000, scoped, tag = 'input window, operand 8']
    #allocation9 [shape = 's32[2]{0}', space=sflag, size = 0x8, scoped, tag = 'scoped memory for tpu_custom_call.1']
    #allocation10 [shape = 'u8[65536]{0}', space=vmem, size = 0x10000, scoped, tag = 'output window, operand 0']
    %15 = vsyncpa [#allocation6], 0
    %s16 = scalar_lea.sflag [#allocation6], 1
    %17 = vsyncpa %s16, 0
    %18 = vsyncpa [#allocation9], 0
    %s19 = scalar_lea.sflag [#allocation9], 1
    %20 = vsyncpa %s19, 0
    %21 = vsyncpa [#allocation7], 0
    %s22 = scalar_lea.sflag [#allocation7], 1
    %23 = vsyncpa %s22, 0
    loop: start=0, step=1, limit=6
    $region2: #{tpu_custom_call.1} parent=1 // loop_pre_header
      _
    $region3: #{tpu_custom_call.1} parent=1 // loop_header
      %s25 = sphi 0, %s29
      %p26 = scmp.ge.s32.totalorder %s25, 6
      %s32 = sphi 0, %s44
      %s33 = sphi 0, %s40
      %s34 = sphi 0, %s32
      %s35 = sphi 0, %s33
      %s36 = sphi 0, %s34
      %s37 = sphi 0, %s35
      %s45 = sphi 0, %s45
      %s47 = sphi 0, %s45
      %s48 = sphi 0, %s47
      %s62 = sphi 0, %s48
      %s66 = sphi 0, %s66
      %s68 = sphi 0, %s66
      %s69 = sphi 0, %s68
      %s83 = sphi 0, %s69
      %s87 = sphi 0, %s87
      %s89 = sphi 0, %s87
      %s90 = sphi 0, %s89
      %s104 = sphi 0, %s90
      %s108 = sphi 0, %s108
      %s110 = sphi 0, %s108
      %s111 = sphi 0, %s110
      %s125 = sphi 0, %s111
      %s129 = sphi 0, %s129
      %s131 = sphi 0, %s129
      %s132 = sphi 0, %s131
      %s146 = sphi 0, %s132
      %s150 = sphi 0, %s150
      %s152 = sphi 0, %s150
      %s153 = sphi 0, %s152
      %s167 = sphi 0, %s153
      %s171 = sphi 0, %s171
      %s173 = sphi 0, %s171
      %s174 = sphi 0, %s173
      %s188 = sphi 0, %s174
      %s194 = sphi 0, %s196
      %s197 = sphi 0, %s194
      %s198 = sphi 0, %s197
      %s214 = sphi 0, %s198
      %s222 = sphi 0, %s224
      %s225 = sphi 0, %s222
      %s226 = sphi 0, %s225
      %s242 = sphi 0, %s226
      %s250 = sphi 0, %s252
      %s253 = sphi 0, %s250
      %s254 = sphi 0, %s253
      %s270 = sphi 0, %s254
    $region4: #{tpu_custom_call.1} parent=1 // loop_header_branch
      %28 = sbr.rel (%p26) target = $region8
    $region5: #{tpu_custom_call.1} parent=1 // loop_body
      %s30 = ssub.s32 %s25, 1
      %s31 = ssub.s32 %s25, 2
      %s38 = sadd.s32 1, %s33
      %p39 = scmp.ge.s32.totalorder %s38, 2
      %s40 = scalar_select %p39, 0, %s38
      %s41 = sadd.s32 1, %s32
      %s42 = scalar_select %p39, %s41, %s32
      %p43 = scmp.ge.s32.totalorder %s42, 2
      %s44 = scalar_select %p43, 0, %s42
      %s46 = sadd.s32 %s45, 1
      %p49 = scmp.eq.s32.totalorder %s25, 3
      %p50 = scmp.ne.s32.totalorder %s45, %s47
      %p51 = scmp.eq.s32.totalorder %s25, 0
      %p52 = por %p50, %p51
      %p53 = scmp.ne.s32.totalorder %s45, %s47
      %p54 = scmp.eq.s32.totalorder %s30, 3
      %p55 = por %p53, %p54
      %p56 = scmp.ne.s32.totalorder %s47, %s48
      %p57 = scmp.eq.s32.totalorder %s30, 0
      %p58 = por %p56, %p57
      %p59 = scmp.ne.s32.totalorder %s47, %s48
      %p60 = scmp.eq.s32.totalorder %s31, 3
      %p61 = por %p59, %p60
      %p63 = scmp.ne.s32.totalorder %s48, %s62
      %p64 = scmp.eq.s32.totalorder %s31, 0
      %p65 = por %p63, %p64
      %s67 = sadd.s32 %s66, 1
      %p70 = scmp.eq.s32.totalorder %s25, 3
      %p71 = scmp.ne.s32.totalorder %s66, %s68
      %p72 = scmp.eq.s32.totalorder %s25, 0
      %p73 = por %p71, %p72
      %p74 = scmp.ne.s32.totalorder %s66, %s68
      %p75 = scmp.eq.s32.totalorder %s30, 3
      %p76 = por %p74, %p75
      %p77 = scmp.ne.s32.totalorder %s68, %s69
      %p78 = scmp.eq.s32.totalorder %s30, 0
      %p79 = por %p77, %p78
      %p80 = scmp.ne.s32.totalorder %s68, %s69
      %p81 = scmp.eq.s32.totalorder %s31, 3
      %p82 = por %p80, %p81
      %p84 = scmp.ne.s32.totalorder %s69, %s83
      %p85 = scmp.eq.s32.totalorder %s31, 0
      %p86 = por %p84, %p85
      %s88 = sadd.s32 %s87, 1
      %p91 = scmp.eq.s32.totalorder %s25, 3
      %p92 = scmp.ne.s32.totalorder %s87, %s89
      %p93 = scmp.eq.s32.totalorder %s25, 0
      %p94 = por %p92, %p93
      %p95 = scmp.ne.s32.totalorder %s87, %s89
      %p96 = scmp.eq.s32.totalorder %s30, 3
      %p97 = por %p95, %p96
      %p98 = scmp.ne.s32.totalorder %s89, %s90
      %p99 = scmp.eq.s32.totalorder %s30, 0
      %p100 = por %p98, %p99
      %p101 = scmp.ne.s32.totalorder %s89, %s90
      %p102 = scmp.eq.s32.totalorder %s31, 3
      %p103 = por %p101, %p102
      %p105 = scmp.ne.s32.totalorder %s90, %s104
      %p106 = scmp.eq.s32.totalorder %s31, 0
      %p107 = por %p105, %p106
      %s109 = sadd.s32 %s108, 1
      %p112 = scmp.eq.s32.totalorder %s25, 3
      %p113 = scmp.ne.s32.totalorder %s108, %s110
      %p114 = scmp.eq.s32.totalorder %s25, 0
      %p115 = por %p113, %p114
      %p116 = scmp.ne.s32.totalorder %s108, %s110
      %p117 = scmp.eq.s32.totalorder %s30, 3
      %p118 = por %p116, %p117
      %p119 = scmp.ne.s32.totalorder %s110, %s111
      %p120 = scmp.eq.s32.totalorder %s30, 0
      %p121 = por %p119, %p120
      %p122 = scmp.ne.s32.totalorder %s110, %s111
      %p123 = scmp.eq.s32.totalorder %s31, 3
      %p124 = por %p122, %p123
      %p126 = scmp.ne.s32.totalorder %s111, %s125
      %p127 = scmp.eq.s32.totalorder %s31, 0
      %p128 = por %p126, %p127
      %s130 = sadd.s32 %s129, 1
      %p133 = scmp.eq.s32.totalorder %s25, 3
      %p134 = scmp.ne.s32.totalorder %s129, %s131
      %p135 = scmp.eq.s32.totalorder %s25, 0
      %p136 = por %p134, %p135
      %p137 = scmp.ne.s32.totalorder %s129, %s131
      %p138 = scmp.eq.s32.totalorder %s30, 3
      %p139 = por %p137, %p138
      %p140 = scmp.ne.s32.totalorder %s131, %s132
      %p141 = scmp.eq.s32.totalorder %s30, 0
      %p142 = por %p140, %p141
      %p143 = scmp.ne.s32.totalorder %s131, %s132
      %p144 = scmp.eq.s32.totalorder %s31, 3
      %p145 = por %p143, %p144
      %p147 = scmp.ne.s32.totalorder %s132, %s146
      %p148 = scmp.eq.s32.totalorder %s31, 0
      %p149 = por %p147, %p148
      %s151 = sadd.s32 %s150, 1
      %p154 = scmp.eq.s32.totalorder %s25, 3
      %p155 = scmp.ne.s32.totalorder %s150, %s152
      %p156 = scmp.eq.s32.totalorder %s25, 0
      %p157 = por %p155, %p156
      %p158 = scmp.ne.s32.totalorder %s150, %s152
      %p159 = scmp.eq.s32.totalorder %s30, 3
      %p160 = por %p158, %p159
      %p161 = scmp.ne.s32.totalorder %s152, %s153
      %p162 = scmp.eq.s32.totalorder %s30, 0
      %p163 = por %p161, %p162
      %p164 = scmp.ne.s32.totalorder %s152, %s153
      %p165 = scmp.eq.s32.totalorder %s31, 3
      %p166 = por %p164, %p165
      %p168 = scmp.ne.s32.totalorder %s153, %s167
      %p169 = scmp.eq.s32.totalorder %s31, 0
      %p170 = por %p168, %p169
      %s172 = sadd.s32 %s171, 1
      %p175 = scmp.eq.s32.totalorder %s25, 3
      %p176 = scmp.ne.s32.totalorder %s171, %s173
      %p177 = scmp.eq.s32.totalorder %s25, 0
      %p178 = por %p176, %p177
      %p179 = scmp.ne.s32.totalorder %s171, %s173
      %p180 = scmp.eq.s32.totalorder %s30, 3
      %p181 = por %p179, %p180
      %p182 = scmp.ne.s32.totalorder %s173, %s174
      %p183 = scmp.eq.s32.totalorder %s30, 0
      %p184 = por %p182, %p183
      %p185 = scmp.ne.s32.totalorder %s173, %s174
      %p186 = scmp.eq.s32.totalorder %s31, 3
      %p187 = por %p185, %p186
      %p189 = scmp.ne.s32.totalorder %s174, %s188
      %p190 = scmp.eq.s32.totalorder %s31, 0
      %p191 = por %p189, %p190
      %s192 = ssub.s32 %s32, %s44
      %p193 = scmp.eq.s32.totalorder %s192, 0
      %s195 = sadd.s32 %s194, 1
      %s196 = scalar_select %p193, %s194, %s195
      %p199 = pneg %p193
      %p200 = scmp.eq.s32.totalorder %s25, 3
      %p201 = por %p199, %p200
      %p202 = scmp.ne.s32.totalorder %s194, %s197
      %p203 = scmp.eq.s32.totalorder %s25, 0
      %p204 = por %p202, %p203
      %p205 = scmp.ne.s32.totalorder %s194, %s197
      %p206 = scmp.eq.s32.totalorder %s30, 3
      %p207 = por %p205, %p206
      %p208 = scmp.ne.s32.totalorder %s197, %s198
      %p209 = scmp.eq.s32.totalorder %s30, 0
      %p210 = por %p208, %p209
      %p211 = scmp.ne.s32.totalorder %s197, %s198
      %p212 = scmp.eq.s32.totalorder %s31, 3
      %p213 = por %p211, %p212
      %p215 = scmp.ne.s32.totalorder %s198, %s214
      %p216 = scmp.eq.s32.totalorder %s31, 0
      %p217 = por %p215, %p216
      %s218 = ssub.s32 %s32, %s44
      %s219 = ssub.s32 %s33, %s40
      %s220 = sor.u32 %s218, %s219
      %p221 = scmp.eq.s32.totalorder %s220, 0
      %s223 = sadd.s32 %s222, 1
      %s224 = scalar_select %p221, %s222, %s223
      %p227 = pneg %p221
      %p228 = scmp.eq.s32.totalorder %s25, 3
      %p229 = por %p227, %p228
      %p230 = scmp.ne.s32.totalorder %s222, %s225
      %p231 = scmp.eq.s32.totalorder %s25, 0
      %p232 = por %p230, %p231
      %p233 = scmp.ne.s32.totalorder %s222, %s225
      %p234 = scmp.eq.s32.totalorder %s30, 3
      %p235 = por %p233, %p234
      %p236 = scmp.ne.s32.totalorder %s225, %s226
      %p237 = scmp.eq.s32.totalorder %s30, 0
      %p238 = por %p236, %p237
      %p239 = scmp.ne.s32.totalorder %s225, %s226
      %p240 = scmp.eq.s32.totalorder %s31, 3
      %p241 = por %p239, %p240
      %p243 = scmp.ne.s32.totalorder %s226, %s242
      %p244 = scmp.eq.s32.totalorder %s31, 0
      %p245 = por %p243, %p244
      %s246 = ssub.s32 %s32, %s44
      %s247 = ssub.s32 %s33, %s40
      %s248 = sor.u32 %s246, %s247
      %p249 = scmp.eq.s32.totalorder %s248, 0
      %s251 = sadd.s32 %s250, 1
      %s252 = scalar_select %p249, %s250, %s251
      %p255 = pneg %p249
      %p256 = scmp.eq.s32.totalorder %s25, 3
      %p257 = por %p255, %p256
      %p258 = scmp.ne.s32.totalorder %s250, %s253
      %p259 = scmp.eq.s32.totalorder %s25, 0
      %p260 = por %p258, %p259
      %p261 = scmp.ne.s32.totalorder %s250, %s253
      %p262 = scmp.eq.s32.totalorder %s30, 3
      %p263 = por %p261, %p262
      %p264 = scmp.ne.s32.totalorder %s253, %s254
      %p265 = scmp.eq.s32.totalorder %s30, 0
      %p266 = por %p264, %p265
      %p267 = scmp.ne.s32.totalorder %s253, %s254
      %p268 = scmp.eq.s32.totalorder %s31, 3
      %p269 = por %p267, %p268
      %p271 = scmp.ne.s32.totalorder %s254, %s270
      %p272 = scmp.eq.s32.totalorder %s31, 0
      %p273 = por %p271, %p272
      %p274 = scmp.le.s32.totalorder 1, %s25
      %p275 = scmp.lt.s32.totalorder %s25, 5
      %p276 = pnand %p274, %p275
      %p277 = pneg %p276
      // Predicated region
      $region9: #{tpu_custom_call.1} parent=5 // pred_check
        _
      $region10: #{tpu_custom_call.1} parent=5 // pred_check_branch
        %279 = sbr.rel (%p276) target = $region12
      $region11: #{tpu_custom_call.1} parent=5 // pred_region
        %s280 = ssub.s32 %s25, 1
        // Predicated region
        $region13: #{tpu_custom_call.1} parent=11 // pred_check
          %p281 = pneg %p58
        $region14: #{tpu_custom_call.1} parent=11 // pred_check_branch
          %283 = sbr.rel (%p281) target = $region16
        $region15: #{tpu_custom_call.1} parent=11 // pred_region
          _
        $region16: #{tpu_custom_call.1} parent=11 // pred_fallthru
          _
        // Predicated region
        $region17: #{tpu_custom_call.1} parent=11 // pred_check
          %p284 = pneg %p79
        $region18: #{tpu_custom_call.1} parent=11 // pred_check_branch
          %286 = sbr.rel (%p284) target = $region20
        $region19: #{tpu_custom_call.1} parent=11 // pred_region
          _
        $region20: #{tpu_custom_call.1} parent=11 // pred_fallthru
          _
        // Predicated region
        $region21: #{tpu_custom_call.1} parent=11 // pred_check
          %p287 = pneg %p100
        $region22: #{tpu_custom_call.1} parent=11 // pred_check_branch
          %289 = sbr.rel (%p287) target = $region24
        $region23: #{tpu_custom_call.1} parent=11 // pred_region
          _
        $region24: #{tpu_custom_call.1} parent=11 // pred_fallthru
          _
        // Predicated region
        $region25: #{tpu_custom_call.1} parent=11 // pred_check
          %p290 = pneg %p121
        $region26: #{tpu_custom_call.1} parent=11 // pred_check_branch
          %292 = sbr.rel (%p290) target = $region28
        $region27: #{tpu_custom_call.1} parent=11 // pred_region
          _
        $region28: #{tpu_custom_call.1} parent=11 // pred_fallthru
          _
        // Predicated region
        $region29: #{tpu_custom_call.1} parent=11 // pred_check
          %p293 = pneg %p142
        $region30: #{tpu_custom_call.1} parent=11 // pred_check_branch
          %295 = sbr.rel (%p293) target = $region32
        $region31: #{tpu_custom_call.1} parent=11 // pred_region
          _
        $region32: #{tpu_custom_call.1} parent=11 // pred_fallthru
          _
        // Predicated region
        $region33: #{tpu_custom_call.1} parent=11 // pred_check
          %p296 = pneg %p163
        $region34: #{tpu_custom_call.1} parent=11 // pred_check_branch
          %298 = sbr.rel (%p296) target = $region36
        $region35: #{tpu_custom_call.1} parent=11 // pred_region
          _
        $region36: #{tpu_custom_call.1} parent=11 // pred_fallthru
          _
        // Predicated region
        $region37: #{tpu_custom_call.1} parent=11 // pred_check
          %p299 = pneg %p184
        $region38: #{tpu_custom_call.1} parent=11 // pred_check_branch
          %301 = sbr.rel (%p299) target = $region40
        $region39: #{tpu_custom_call.1} parent=11 // pred_region
          _
        $region40: #{tpu_custom_call.1} parent=11 // pred_fallthru
          _
      $region12: #{tpu_custom_call.1} parent=5 // pred_fallthru
        _
      %p302 = scmp.lt.s32.totalorder %s25, 4
      // Predicated region
      $region41: #{tpu_custom_call.1} parent=5 // pred_check
        %p303 = pneg %p302
      $region42: #{tpu_custom_call.1} parent=5 // pred_check_branch
        %305 = sbr.rel (%p303) target = $region44
      $region43: #{tpu_custom_call.1} parent=5 // pred_region
        // Predicated region
        $region45: #{tpu_custom_call.1} parent=43 // pred_check
          %p306 = pneg %p204
        $region46: #{tpu_custom_call.1} parent=43 // pred_check_branch
          %308 = sbr.rel (%p306) target = $region48
        $region47: #{tpu_custom_call.1} parent=43 // pred_region
          %s309 = sand.u32 %s194, 1
          %s310 = scalar_lea.sflag [#allocation6], %s309
          %s311 = sand.u32 %s194, 1
          %s312 = smul.addr %s311, 128
          %s313 = scalar_lea.vmem [#allocation5], %s312
          %315 = vsyncadd %s310, 0
          %s316 = smul.addr %s32, 16
          %s317 = smul.addr %s316, 8
          %s318 = scalar_lea.hbm %s7, %s317
          %s319 = sshll.u32 %s318, 4
          %s320 = int_to_ptr.hbm [resolvable:$true] %s319
          %s321 = sshll.u32 %s313, 4
          %s322 = int_to_ptr.vmem [resolvable:$true] %s321
          %327 = dma.hbm_to_vmem [thread:$0]  %s320, 2048, %s322, %s310, 256, 256, 16
        $region48: #{tpu_custom_call.1} parent=43 // pred_fallthru
          _
        // Predicated region
        $region49: #{tpu_custom_call.1} parent=43 // pred_check
          %p328 = pneg %p232
        $region50: #{tpu_custom_call.1} parent=43 // pred_check_branch
          %330 = sbr.rel (%p328) target = $region52
        $region51: #{tpu_custom_call.1} parent=43 // pred_region
          %s331 = sand.u32 %s222, 1
          %s332 = scalar_lea.sflag [#allocation9], %s331
          %s333 = sand.u32 %s222, 1
          %s334 = smul.addr %s333, 64
          %s335 = scalar_lea.vmem [#allocation8], %s334
          %337 = vsyncadd %s332, 0
          %s338 = smul.addr %s32, 16
          %s339 = sadd.s32 %s33, %s338
          %s340 = smul.addr %s339, 8
          %s341 = scalar_lea.hbm %s8, %s340
          %s342 = sshll.u32 %s341, 4
          %s343 = int_to_ptr.hbm [resolvable:$true] %s342
          %s344 = sshll.u32 %s335, 4
          %s345 = int_to_ptr.vmem [resolvable:$true] %s344
          %350 = dma.hbm_to_vmem [thread:$0]  %s343, 1024, %s345, %s332, 256, 128, 8
        $region52: #{tpu_custom_call.1} parent=43 // pred_fallthru
          _
      $region44: #{tpu_custom_call.1} parent=5 // pred_fallthru
        _
      %p351 = scmp.le.s32.totalorder 1, %s25
      %p352 = scmp.lt.s32.totalorder %s25, 5
      %p353 = pnand %p351, %p352
      %p354 = pneg %p353
      // Predicated region
      $region53: #{tpu_custom_call.1} parent=5 // pred_check
        _
      $region54: #{tpu_custom_call.1} parent=5 // pred_check_branch
        %356 = sbr.rel (%p353) target = $region56
      $region55: #{tpu_custom_call.1} parent=5 // pred_region
        %s357 = ssub.s32 %s25, 1
        %s358 = sand.u32 %s197, 1
        %s359 = scalar_lea.sflag [#allocation6], %s358
        %s360 = sand.u32 %s197, 1
        %s361 = smul.addr %s360, 128
        %s362 = scalar_lea.vmem [#allocation5], %s361
        // Predicated region
        $region57: #{tpu_custom_call.1} parent=55 // pred_check
          %p363 = pneg %p210
        $region58: #{tpu_custom_call.1} parent=55 // pred_check_branch
          %365 = sbr.rel (%p363) target = $region60
        $region59: #{tpu_custom_call.1} parent=55 // pred_region
          %367 = dma.done %s359, 2048
        $region60: #{tpu_custom_call.1} parent=55 // pred_fallthru
          _
        %s368 = sand.u32 %s225, 1
        %s369 = scalar_lea.sflag [#allocation9], %s368
        %s370 = sand.u32 %s225, 1
        %s371 = smul.addr %s370, 64
        %s372 = scalar_lea.vmem [#allocation8], %s371
        // Predicated region
        $region61: #{tpu_custom_call.1} parent=55 // pred_check
          %p373 = pneg %p238
        $region62: #{tpu_custom_call.1} parent=55 // pred_check_branch
          %375 = sbr.rel (%p373) target = $region64
        $region63: #{tpu_custom_call.1} parent=55 // pred_region
          %377 = dma.done %s369, 1024
        $region64: #{tpu_custom_call.1} parent=55 // pred_fallthru
          _
        %p378 = pneg %p58
        %p379 = pneg %p55
        %p380 = pneg %p79
        %p381 = pneg %p76
        %p382 = pneg %p100
        %p383 = pneg %p97
        %p384 = pneg %p121
        %p385 = pneg %p118
        %p386 = pneg %p142
        %p387 = pneg %p139
        %p388 = pneg %p163
        %p389 = pneg %p160
        %p390 = pneg %p184
        %p391 = pneg %p181
        %s392 = sand.u32 %s197, 1
        %s393 = scalar_lea.sflag [#allocation6], %s392
        %s394 = sand.u32 %s197, 1
        %s395 = smul.addr %s394, 128
        %s396 = scalar_lea.vmem [#allocation5], %s395
        %p397 = pneg %p210
        %p398 = pneg %p207
        %s399 = sand.u32 %s225, 1
        %s400 = scalar_lea.sflag [#allocation9], %s399
        %s401 = sand.u32 %s225, 1
        %s402 = smul.addr %s401, 64
        %s403 = scalar_lea.vmem [#allocation8], %s402
        %p404 = pneg %p238
        %p405 = pneg %p235
        %p406 = pneg %p266
        %p407 = pneg %p263
        %s408 = sand.u32 %s253, 1
        %s409 = scalar_lea.sflag [#allocation7], %s408
        %s410 = sand.u32 %s253, 1
        %s411 = smul.addr %s410, 64
        %s412 = scalar_lea.vmem [#allocation10], %s411
        %p414 = scmp.eq.s32.totalorder %s35, 0
        // Predicated region
        $region65: #{tpu_custom_call.1} parent=55 // pred_check
          %p415 = pneg %p414
        $region66: #{tpu_custom_call.1} parent=55 // pred_check_branch
          %417 = sbr.rel (%p415) target = $region68
        $region67: #{tpu_custom_call.1} parent=55 // pred_region
          %v418 = vld [vmem:[%s362] sm:$0xff]
          %v419 = vld [vmem:[%s362 + $0x8] sm:$0xff]
          %v420 = vld [vmem:[%s362 + $0x10] sm:$0xff]
          %v421 = vld [vmem:[%s362 + $0x18] sm:$0xff]
          %v422 = vld [vmem:[%s362 + $0x20] sm:$0xff]
          %v423 = vld [vmem:[%s362 + $0x28] sm:$0xff]
          %v424 = vld [vmem:[%s362 + $0x30] sm:$0xff]
          %v425 = vld [vmem:[%s362 + $0x38] sm:$0xff]
          %v426 = vld [vmem:[%s362 + $0x40] sm:$0xff]
          %v427 = vld [vmem:[%s362 + $0x48] sm:$0xff]
          %v428 = vld [vmem:[%s362 + $0x50] sm:$0xff]
          %v429 = vld [vmem:[%s362 + $0x58] sm:$0xff]
          %v430 = vld [vmem:[%s362 + $0x60] sm:$0xff]
          %v431 = vld [vmem:[%s362 + $0x68] sm:$0xff]
          %v432 = vld [vmem:[%s362 + $0x70] sm:$0xff]
          %v433 = vld [vmem:[%s362 + $0x78] sm:$0xff]
          %v434 = vpack.c.bf16 %v420, %v418
          %v435 = vpack.c.bf16 %v421, %v419
          %v436 = vpack.c.bf16 %v424, %v422
          %v437 = vpack.c.bf16 %v425, %v423
          %v438 = vpack.c.bf16 %v428, %v426
          %v439 = vpack.c.bf16 %v429, %v427
          %v440 = vpack.c.bf16 %v432, %v430
          %v441 = vpack.c.bf16 %v433, %v431
          %v442 = vld [vmem:[%s3] sm:$0xf]
          %v443 = vld [vmem:[%s4] sm:$0xff]
          %445 = vset.pattern.permute.xlu0 0
          %446 = vperm.xlu0 %445, %v443
          %v447 = vpop.permute.xlu0 %446
          %vm449 = vcmask 523264
          %v451 = vsel %vm449, %v442, 0
          %453 = vmatpush.bf16.msra.mxu0 0
          %454 = vmatpush.bf16.msra.mxu0 0
          %455 = vmatpush.bf16.msra.mxu0 0
          %456 = vmatpush.bf16.msra.mxu0 0
          %457 = vmatpush.bf16.msra.mxu0 %v440
          %458 = vmatpush.bf16.msra.mxu0 %v438
          %459 = vmatpush.bf16.msra.mxu0 %v436
          %460 = vmatpush.bf16.msra.mxu0 %v434
          %461 = vmatmul.bf16.gmra.mxu0 %v451
          %v462 = vpop.f32.mrf.mxu0
          %v463 = vadd.f32 %v447, %v462
          %v464 = vpop.f32.mrf.mxu0
          %465 = vdwg.mxu0
          %466 = vmatpush.bf16.msra.mxu0 0
          %467 = vmatpush.bf16.msra.mxu0 0
          %468 = vmatpush.bf16.msra.mxu0 0
          %469 = vmatpush.bf16.msra.mxu0 0
          %470 = vmatpush.bf16.msra.mxu0 %v441
          %471 = vmatpush.bf16.msra.mxu0 %v439
          %472 = vmatpush.bf16.msra.mxu0 %v437
          %473 = vmatpush.bf16.msra.mxu0 %v435
          %474 = vmatmul.bf16.gmra.mxu0 %v451
          %v475 = vpop.f32.mrf.mxu0
          %v476 = vadd.f32 %v447, %v475
          %v477 = vpop.f32.mrf.mxu0
          %478 = vdwg.mxu0
          %v479 = vpack.c.bf16 %v476, %v463
          %480 = vst [vmem:[#allocation2] sm:$0xff] %v479
          %v481 = vld [vmem:[%s5] sm:$0xf]
          %v482 = vld [vmem:[%s5 + $0x4] sm:$0xf]
          %v483 = vld [vmem:[%s5 + $0x8] sm:$0xf]
          %v484 = vld [vmem:[%s5 + $0xc] sm:$0xf]
          %v485 = vld [vmem:[%s5 + $0x10] sm:$0xf]
          %v486 = vld [vmem:[%s5 + $0x14] sm:$0xf]
          %v487 = vld [vmem:[%s5 + $0x18] sm:$0xf]
          %v488 = vld [vmem:[%s5 + $0x1c] sm:$0xf]
          %v489 = vld [vmem:[%s6] sm:$0xff]
          %v490 = vld [vmem:[%s6 + $0x8] sm:$0xff]
          %v491 = vld [vmem:[%s6 + $0x10] sm:$0xff]
          %v492 = vld [vmem:[%s6 + $0x18] sm:$0xff]
          %v493 = vld [vmem:[%s6 + $0x20] sm:$0xff]
          %v494 = vld [vmem:[%s6 + $0x28] sm:$0xff]
          %v495 = vld [vmem:[%s6 + $0x30] sm:$0xff]
          %v496 = vld [vmem:[%s6 + $0x38] sm:$0xff]
          %498 = vset.pattern.permute.xlu0 0
          %499 = vperm.xlu0 %498, %v489
          %v500 = vpop.permute.xlu0 %499
          %503 = vset.pattern.permute.xlu0 0
          %504 = vperm.xlu0 %503, %v490
          %v505 = vpop.permute.xlu0 %504
          %508 = vset.pattern.permute.xlu0 0
          %509 = vperm.xlu0 %508, %v491
          %v510 = vpop.permute.xlu0 %509
          %513 = vset.pattern.permute.xlu0 0
          %514 = vperm.xlu0 %513, %v492
          %v515 = vpop.permute.xlu0 %514
          %518 = vset.pattern.permute.xlu0 0
          %519 = vperm.xlu0 %518, %v493
          %v520 = vpop.permute.xlu0 %519
          %523 = vset.pattern.permute.xlu0 0
          %524 = vperm.xlu0 %523, %v494
          %v525 = vpop.permute.xlu0 %524
          %528 = vset.pattern.permute.xlu0 0
          %529 = vperm.xlu0 %528, %v495
          %v530 = vpop.permute.xlu0 %529
          %533 = vset.pattern.permute.xlu0 0
          %534 = vperm.xlu0 %533, %v496
          %v535 = vpop.permute.xlu0 %534
          %v545 = vunpack.c.l.b16 %v481
          %v546 = vunpack.c.l.b16 %v482
          %v547 = vunpack.c.l.b16 %v483
          %v548 = vunpack.c.l.b16 %v484
          %v549 = vunpack.c.l.b16 %v485
          %v550 = vunpack.c.l.b16 %v486
          %v551 = vunpack.c.l.b16 %v487
          %v552 = vunpack.c.l.b16 %v488
          %v553 = vpack.c.b16 %v546, %v545
          %v554 = vpack.c.b16 %v548, %v547
          %v555 = vpack.c.b16 %v550, %v549
          %v556 = vpack.c.b16 %v552, %v551
          %v558 = vsel %vm449, %v553, 0
          %v561 = vsel %vm449, %v554, 0
          %v564 = vsel %vm449, %v555, 0
          %v567 = vsel %vm449, %v556, 0
          %569 = vmatpush.bf16.msra.mxu0 0
          %570 = vmatpush.bf16.msra.mxu0 0
          %571 = vmatpush.bf16.msra.mxu0 0
          %572 = vmatpush.bf16.msra.mxu0 0
          %573 = vmatpush.bf16.msra.mxu0 %v440
          %574 = vmatpush.bf16.msra.mxu0 %v438
          %575 = vmatpush.bf16.msra.mxu0 %v436
          %576 = vmatpush.bf16.msra.mxu0 %v434
          %577 = vmatmul.bf16.gmra.mxu0 %v558
          %v578 = vpop.f32.mrf.mxu0
          %v579 = vadd.f32 %v500, %v578
          %v580 = vpop.f32.mrf.mxu0
          %v581 = vadd.f32 %v505, %v580
          %582 = vmatmul.bf16.gmra.mxu0 %v561
          %v583 = vpop.f32.mrf.mxu0
          %v584 = vadd.f32 %v510, %v583
          %v585 = vpop.f32.mrf.mxu0
          %v586 = vadd.f32 %v515, %v585
          %587 = vmatmul.bf16.gmra.mxu0 %v564
          %v588 = vpop.f32.mrf.mxu0
          %v589 = vadd.f32 %v520, %v588
          %v590 = vpop.f32.mrf.mxu0
          %v591 = vadd.f32 %v525, %v590
          %592 = vmatmul.bf16.gmra.mxu0 %v567
          %v593 = vpop.f32.mrf.mxu0
          %v594 = vadd.f32 %v530, %v593
          %v595 = vpop.f32.mrf.mxu0
          %v596 = vadd.f32 %v535, %v595
          %597 = vdwg.mxu0
          %598 = vmatpush.bf16.msra.mxu0 0
          %599 = vmatpush.bf16.msra.mxu0 0
          %600 = vmatpush.bf16.msra.mxu0 0
          %601 = vmatpush.bf16.msra.mxu0 0
          %602 = vmatpush.bf16.msra.mxu0 %v441
          %603 = vmatpush.bf16.msra.mxu0 %v439
          %604 = vmatpush.bf16.msra.mxu0 %v437
          %605 = vmatpush.bf16.msra.mxu0 %v435
          %606 = vmatmul.bf16.gmra.mxu0 %v558
          %v607 = vpop.f32.mrf.mxu0
          %v608 = vadd.f32 %v500, %v607
          %v609 = vpop.f32.mrf.mxu0
          %v610 = vadd.f32 %v505, %v609
          %611 = vmatmul.bf16.gmra.mxu0 %v561
          %v612 = vpop.f32.mrf.mxu0
          %v613 = vadd.f32 %v510, %v612
          %v614 = vpop.f32.mrf.mxu0
          %v615 = vadd.f32 %v515, %v614
          %616 = vmatmul.bf16.gmra.mxu0 %v564
          %v617 = vpop.f32.mrf.mxu0
          %v618 = vadd.f32 %v520, %v617
          %v619 = vpop.f32.mrf.mxu0
          %v620 = vadd.f32 %v525, %v619
          %621 = vmatmul.bf16.gmra.mxu0 %v567
          %v622 = vpop.f32.mrf.mxu0
          %v623 = vadd.f32 %v530, %v622
          %v624 = vpop.f32.mrf.mxu0
          %v625 = vadd.f32 %v535, %v624
          %626 = vdwg.mxu0
          %v627 = vpack.c.bf16 %v608, %v579
          %v628 = vpack.c.bf16 %v610, %v581
          %v629 = vpack.c.bf16 %v613, %v584
          %v630 = vpack.c.bf16 %v615, %v586
          %v631 = vpack.c.bf16 %v618, %v589
          %v632 = vpack.c.bf16 %v620, %v591
          %v633 = vpack.c.bf16 %v623, %v594
          %v634 = vpack.c.bf16 %v625, %v596
          %635 = vst [vmem:[#allocation3] sm:$0xff] %v627
          %636 = vst [vmem:[#allocation3 + $0x8] sm:$0xff] %v628
          %637 = vst [vmem:[#allocation3 + $0x10] sm:$0xff] %v629
          %638 = vst [vmem:[#allocation3 + $0x18] sm:$0xff] %v630
          %639 = vst [vmem:[#allocation3 + $0x20] sm:$0xff] %v631
          %640 = vst [vmem:[#allocation3 + $0x28] sm:$0xff] %v632
          %641 = vst [vmem:[#allocation3 + $0x30] sm:$0xff] %v633
          %642 = vst [vmem:[#allocation3 + $0x38] sm:$0xff] %v634
        $region68: #{tpu_custom_call.1} parent=55 // pred_fallthru
          _
        %v643 = vld [vmem:[%s372] sm:$0xff]
        %v644 = vld [vmem:[%s372 + $0x8] sm:$0xff]
        %v645 = vld [vmem:[%s372 + $0x10] sm:$0xff]
        %v646 = vld [vmem:[%s372 + $0x18] sm:$0xff]
        %v647 = vld [vmem:[%s372 + $0x20] sm:$0xff]
        %v648 = vld [vmem:[%s372 + $0x28] sm:$0xff]
        %v649 = vld [vmem:[%s372 + $0x30] sm:$0xff]
        %v650 = vld [vmem:[%s372 + $0x38] sm:$0xff]
        %v651 = vld [vmem:[%s1] sm:$0xf]
        %v652 = vpack.c.bf16 %v644, %v643
        %v653 = vpack.c.bf16 %v646, %v645
        %v654 = vpack.c.bf16 %v648, %v647
        %v655 = vpack.c.bf16 %v650, %v649
        %v656 = vld [vmem:[%s2] sm:$0xff]
        %658 = vset.pattern.permute.xlu0 0
        %659 = vperm.xlu0 %658, %v656
        %v660 = vpop.permute.xlu0 %659
        %vm662 = vcmask 523264
        %v664 = vsel %vm662, %v651, 0
        %666 = vmatpush.bf16.msra.mxu0 0
        %667 = vmatpush.bf16.msra.mxu0 0
        %668 = vmatpush.bf16.msra.mxu0 0
        %669 = vmatpush.bf16.msra.mxu0 0
        %670 = vmatpush.bf16.msra.mxu0 %v655
        %671 = vmatpush.bf16.msra.mxu0 %v654
        %672 = vmatpush.bf16.msra.mxu0 %v653
        %673 = vmatpush.bf16.msra.mxu0 %v652
        %674 = vmatmul.bf16.gmra.mxu0 %v664
        %v675 = vpop.f32.mrf.mxu0
        %v676 = vadd.f32 %v660, %v675
        %v677 = vpop.f32.mrf.mxu0
        %678 = vdwg.mxu0
        %v679 = vpack.c.bf16 %v676, %v676
        %v680 = vld [vmem:[#allocation2] sm:$0xff]
        %681 = vxpose.xlu0.c.b16.start [1/8] %v679, 128
        %682 = vxpose.xlu0.c.b16.cont [2/8] 0, 128
        %683 = vxpose.xlu0.c.b16.cont [3/8] 0, 128
        %684 = vxpose.xlu0.c.b16.cont [4/8] 0, 128
        %685 = vxpose.xlu0.c.b16.cont [5/8] 0, 128
        %686 = vxpose.xlu0.c.b16.cont [6/8] 0, 128
        %687 = vxpose.xlu0.c.b16.cont [7/8] 0, 128
        %688 = vxpose.xlu0.c.b16.end [8/8] 0, 128
        %v689 = vpop.trf.xlu0
        %v690 = vpop.trf.xlu0
        %v691 = vpop.trf.xlu0
        %v692 = vpop.trf.xlu0
        %v693 = vpop.trf.xlu0
        %v694 = vpop.trf.xlu0
        %v695 = vpop.trf.xlu0
        %v696 = vpop.trf.xlu0
        %v698 = vunpack.c.l.b16 %v680
        %v699 = vunpack.c.h.b16 %v680
        %v700 = vpack.c.b16 %v698, %v698
        %v701 = vpack.c.b16 %v699, %v699
        %vm702 = vcmask 64512
        %v704 = vsel %vm702, %v689, 0
        %v707 = vsel %vm702, %v690, 0
        %v710 = vsel %vm702, %v691, 0
        %v713 = vsel %vm702, %v692, 0
        %v716 = vsel %vm702, %v693, 0
        %v719 = vsel %vm702, %v694, 0
        %v722 = vsel %vm702, %v695, 0
        %v725 = vsel %vm702, %v696, 0
        %vm727 = vcmask 1043456
        %v729 = vsel %vm727, %v700, 0
        %v732 = vsel %vm727, %v701, 0
        %734 = vmatpush.bf16.msra.mxu0 0
        %735 = vmatpush.bf16.msra.mxu0 0
        %736 = vmatpush.bf16.msra.mxu0 0
        %737 = vmatpush.bf16.msra.mxu0 0
        %738 = vmatpush.bf16.msra.mxu0 0
        %739 = vmatpush.bf16.msra.mxu0 0
        %740 = vmatpush.bf16.msra.mxu0 0
        %741 = vmatpush.bf16.msra.mxu0 %v729
        %742 = vmatmul.bf16.gmra.mxu0 %v704
        %v743 = vpop.f32.mrf.mxu0
        %v744 = vadd.f32 0.0, %v743
        %v745 = vpop.f32.mrf.mxu0
        %v746 = vadd.f32 0.0, %v745
        %747 = vmatmul.bf16.gmra.mxu0 %v707
        %v748 = vpop.f32.mrf.mxu0
        %v749 = vadd.f32 0.0, %v748
        %v750 = vpop.f32.mrf.mxu0
        %v751 = vadd.f32 0.0, %v750
        %752 = vmatmul.bf16.gmra.mxu0 %v710
        %v753 = vpop.f32.mrf.mxu0
        %v754 = vadd.f32 0.0, %v753
        %v755 = vpop.f32.mrf.mxu0
        %v756 = vadd.f32 0.0, %v755
        %757 = vmatmul.bf16.gmra.mxu0 %v713
        %v758 = vpop.f32.mrf.mxu0
        %v759 = vadd.f32 0.0, %v758
        %v760 = vpop.f32.mrf.mxu0
        %v761 = vadd.f32 0.0, %v760
        %762 = vmatmul.bf16.gmra.mxu0 %v716
        %v763 = vpop.f32.mrf.mxu0
        %v764 = vadd.f32 0.0, %v763
        %v765 = vpop.f32.mrf.mxu0
        %v766 = vadd.f32 0.0, %v765
        %767 = vmatmul.bf16.gmra.mxu0 %v719
        %v768 = vpop.f32.mrf.mxu0
        %v769 = vadd.f32 0.0, %v768
        %v770 = vpop.f32.mrf.mxu0
        %v771 = vadd.f32 0.0, %v770
        %772 = vmatmul.bf16.gmra.mxu0 %v722
        %v773 = vpop.f32.mrf.mxu0
        %v774 = vadd.f32 0.0, %v773
        %v775 = vpop.f32.mrf.mxu0
        %v776 = vadd.f32 0.0, %v775
        %777 = vmatmul.bf16.gmra.mxu0 %v725
        %v778 = vpop.f32.mrf.mxu0
        %v779 = vadd.f32 0.0, %v778
        %v780 = vpop.f32.mrf.mxu0
        %v781 = vadd.f32 0.0, %v780
        %782 = vdwg.mxu0
        %783 = vmatpush.bf16.msra.mxu0 0
        %784 = vmatpush.bf16.msra.mxu0 0
        %785 = vmatpush.bf16.msra.mxu0 0
        %786 = vmatpush.bf16.msra.mxu0 0
        %787 = vmatpush.bf16.msra.mxu0 0
        %788 = vmatpush.bf16.msra.mxu0 0
        %789 = vmatpush.bf16.msra.mxu0 0
        %790 = vmatpush.bf16.msra.mxu0 %v732
        %791 = vmatmul.bf16.gmra.mxu0 %v704
        %v792 = vpop.f32.mrf.mxu0
        %v793 = vadd.f32 0.0, %v792
        %v794 = vpop.f32.mrf.mxu0
        %v795 = vadd.f32 0.0, %v794
        %796 = vmatmul.bf16.gmra.mxu0 %v707
        %v797 = vpop.f32.mrf.mxu0
        %v798 = vadd.f32 0.0, %v797
        %v799 = vpop.f32.mrf.mxu0
        %v800 = vadd.f32 0.0, %v799
        %801 = vmatmul.bf16.gmra.mxu0 %v710
        %v802 = vpop.f32.mrf.mxu0
        %v803 = vadd.f32 0.0, %v802
        %v804 = vpop.f32.mrf.mxu0
        %v805 = vadd.f32 0.0, %v804
        %806 = vmatmul.bf16.gmra.mxu0 %v713
        %v807 = vpop.f32.mrf.mxu0
        %v808 = vadd.f32 0.0, %v807
        %v809 = vpop.f32.mrf.mxu0
        %v810 = vadd.f32 0.0, %v809
        %811 = vmatmul.bf16.gmra.mxu0 %v716
        %v812 = vpop.f32.mrf.mxu0
        %v813 = vadd.f32 0.0, %v812
        %v814 = vpop.f32.mrf.mxu0
        %v815 = vadd.f32 0.0, %v814
        %816 = vmatmul.bf16.gmra.mxu0 %v719
        %v817 = vpop.f32.mrf.mxu0
        %v818 = vadd.f32 0.0, %v817
        %v819 = vpop.f32.mrf.mxu0
        %v820 = vadd.f32 0.0, %v819
        %821 = vmatmul.bf16.gmra.mxu0 %v722
        %v822 = vpop.f32.mrf.mxu0
        %v823 = vadd.f32 0.0, %v822
        %v824 = vpop.f32.mrf.mxu0
        %v825 = vadd.f32 0.0, %v824
        %826 = vmatmul.bf16.gmra.mxu0 %v725
        %v827 = vpop.f32.mrf.mxu0
        %v828 = vadd.f32 0.0, %v827
        %v829 = vpop.f32.mrf.mxu0
        %v830 = vadd.f32 0.0, %v829
        %831 = vdwg.mxu0
        %v832 = vmax.f32 %v744, %v793
        %833 = vmax.xlane.f32.xlu0 %v832
        %v834 = vpop.xlane.xlu0 %833
        %v835 = vmax.f32 %v746, %v795
        %836 = vmax.xlane.f32.xlu0 %v835
        %v837 = vpop.xlane.xlu0 %836
        %v838 = vmax.f32 %v749, %v798
        %839 = vmax.xlane.f32.xlu0 %v838
        %v840 = vpop.xlane.xlu0 %839
        %v841 = vmax.f32 %v751, %v800
        %842 = vmax.xlane.f32.xlu0 %v841
        %v843 = vpop.xlane.xlu0 %842
        %v844 = vmax.f32 %v754, %v803
        %845 = vmax.xlane.f32.xlu0 %v844
        %v846 = vpop.xlane.xlu0 %845
        %v847 = vmax.f32 %v756, %v805
        %848 = vmax.xlane.f32.xlu0 %v847
        %v849 = vpop.xlane.xlu0 %848
        %v850 = vmax.f32 %v759, %v808
        %851 = vmax.xlane.f32.xlu0 %v850
        %v852 = vpop.xlane.xlu0 %851
        %v853 = vmax.f32 %v761, %v810
        %854 = vmax.xlane.f32.xlu0 %v853
        %v855 = vpop.xlane.xlu0 %854
        %v856 = vmax.f32 %v764, %v813
        %857 = vmax.xlane.f32.xlu0 %v856
        %v858 = vpop.xlane.xlu0 %857
        %v859 = vmax.f32 %v766, %v815
        %860 = vmax.xlane.f32.xlu0 %v859
        %v861 = vpop.xlane.xlu0 %860
        %v862 = vmax.f32 %v769, %v818
        %863 = vmax.xlane.f32.xlu0 %v862
        %v864 = vpop.xlane.xlu0 %863
        %v865 = vmax.f32 %v771, %v820
        %866 = vmax.xlane.f32.xlu0 %v865
        %v867 = vpop.xlane.xlu0 %866
        %v868 = vmax.f32 %v774, %v823
        %869 = vmax.xlane.f32.xlu0 %v868
        %v870 = vpop.xlane.xlu0 %869
        %v871 = vmax.f32 %v776, %v825
        %872 = vmax.xlane.f32.xlu0 %v871
        %v873 = vpop.xlane.xlu0 %872
        %v874 = vmax.f32 %v779, %v828
        %875 = vmax.xlane.f32.xlu0 %v874
        %v876 = vpop.xlane.xlu0 %875
        %v877 = vmax.f32 %v781, %v830
        %878 = vmax.xlane.f32.xlu0 %v877
        %v879 = vpop.xlane.xlu0 %878
        %v880 = vsub.f32 %v744, %v834
        %v881 = vsub.f32 %v793, %v834
        %v882 = vsub.f32 %v746, %v837
        %v883 = vsub.f32 %v795, %v837
        %v884 = vsub.f32 %v749, %v840
        %v885 = vsub.f32 %v798, %v840
        %v886 = vsub.f32 %v751, %v843
        %v887 = vsub.f32 %v800, %v843
        %v888 = vsub.f32 %v754, %v846
        %v889 = vsub.f32 %v803, %v846
        %v890 = vsub.f32 %v756, %v849
        %v891 = vsub.f32 %v805, %v849
        %v892 = vsub.f32 %v759, %v852
        %v893 = vsub.f32 %v808, %v852
        %v894 = vsub.f32 %v761, %v855
        %v895 = vsub.f32 %v810, %v855
        %v896 = vsub.f32 %v764, %v858
        %v897 = vsub.f32 %v813, %v858
        %v898 = vsub.f32 %v766, %v861
        %v899 = vsub.f32 %v815, %v861
        %v900 = vsub.f32 %v769, %v864
        %v901 = vsub.f32 %v818, %v864
        %v902 = vsub.f32 %v771, %v867
        %v903 = vsub.f32 %v820, %v867
        %v904 = vsub.f32 %v774, %v870
        %v905 = vsub.f32 %v823, %v870
        %v906 = vsub.f32 %v776, %v873
        %v907 = vsub.f32 %v825, %v873
        %v908 = vsub.f32 %v779, %v876
        %v909 = vsub.f32 %v828, %v876
        %v910 = vsub.f32 %v781, %v879
        %v911 = vsub.f32 %v830, %v879
        %v912 = vmul.f32 %v880, 1.442695
        %v913 = vpow.pop %v912
        %v914 = vmul.f32 %v881, 1.442695
        %v915 = vpow.pop %v914
        %v916 = vmul.f32 %v882, 1.442695
        %v917 = vpow.pop %v916
        %v918 = vmul.f32 %v883, 1.442695
        %v919 = vpow.pop %v918
        %v920 = vmul.f32 %v884, 1.442695
        %v921 = vpow.pop %v920
        %v922 = vmul.f32 %v885, 1.442695
        %v923 = vpow.pop %v922
        %v924 = vmul.f32 %v886, 1.442695
        %v925 = vpow.pop %v924
        %v926 = vmul.f32 %v887, 1.442695
        %v927 = vpow.pop %v926
        %v928 = vmul.f32 %v888, 1.442695
        %v929 = vpow.pop %v928
        %v930 = vmul.f32 %v889, 1.442695
        %v931 = vpow.pop %v930
        %v932 = vmul.f32 %v890, 1.442695
        %v933 = vpow.pop %v932
        %v934 = vmul.f32 %v891, 1.442695
        %v935 = vpow.pop %v934
        %v936 = vmul.f32 %v892, 1.442695
        %v937 = vpow.pop %v936
        %v938 = vmul.f32 %v893, 1.442695
        %v939 = vpow.pop %v938
        %v940 = vmul.f32 %v894, 1.442695
        %v941 = vpow.pop %v940
        %v942 = vmul.f32 %v895, 1.442695
        %v943 = vpow.pop %v942
        %v944 = vmul.f32 %v896, 1.442695
        %v945 = vpow.pop %v944
        %v946 = vmul.f32 %v897, 1.442695
        %v947 = vpow.pop %v946
        %v948 = vmul.f32 %v898, 1.442695
        %v949 = vpow.pop %v948
        %v950 = vmul.f32 %v899, 1.442695
        %v951 = vpow.pop %v950
        %v952 = vmul.f32 %v900, 1.442695
        %v953 = vpow.pop %v952
        %v954 = vmul.f32 %v901, 1.442695
        %v955 = vpow.pop %v954
        %v956 = vmul.f32 %v902, 1.442695
        %v957 = vpow.pop %v956
        %v958 = vmul.f32 %v903, 1.442695
        %v959 = vpow.pop %v958
        %v960 = vmul.f32 %v904, 1.442695
        %v961 = vpow.pop %v960
        %v962 = vmul.f32 %v905, 1.442695
        %v963 = vpow.pop %v962
        %v964 = vmul.f32 %v906, 1.442695
        %v965 = vpow.pop %v964
        %v966 = vmul.f32 %v907, 1.442695
        %v967 = vpow.pop %v966
        %v968 = vmul.f32 %v908, 1.442695
        %v969 = vpow.pop %v968
        %v970 = vmul.f32 %v909, 1.442695
        %v971 = vpow.pop %v970
        %v972 = vmul.f32 %v910, 1.442695
        %v973 = vpow.pop %v972
        %v974 = vmul.f32 %v911, 1.442695
        %v975 = vpow.pop %v974
        %v976 = vadd.f32 %v913, %v915
        %977 = vadd.xlane.f32.xlu0 %v976
        %v978 = vpop.xlane.xlu0 %977
        %v979 = vadd.f32 %v917, %v919
        %980 = vadd.xlane.f32.xlu0 %v979
        %v981 = vpop.xlane.xlu0 %980
        %v982 = vadd.f32 %v921, %v923
        %983 = vadd.xlane.f32.xlu0 %v982
        %v984 = vpop.xlane.xlu0 %983
        %v985 = vadd.f32 %v925, %v927
        %986 = vadd.xlane.f32.xlu0 %v985
        %v987 = vpop.xlane.xlu0 %986
        %v988 = vadd.f32 %v929, %v931
        %989 = vadd.xlane.f32.xlu0 %v988
        %v990 = vpop.xlane.xlu0 %989
        %v991 = vadd.f32 %v933, %v935
        %992 = vadd.xlane.f32.xlu0 %v991
        %v993 = vpop.xlane.xlu0 %992
        %v994 = vadd.f32 %v937, %v939
        %995 = vadd.xlane.f32.xlu0 %v994
        %v996 = vpop.xlane.xlu0 %995
        %v997 = vadd.f32 %v941, %v943
        %998 = vadd.xlane.f32.xlu0 %v997
        %v999 = vpop.xlane.xlu0 %998
        %v1000 = vadd.f32 %v945, %v947
        %1001 = vadd.xlane.f32.xlu0 %v1000
        %v1002 = vpop.xlane.xlu0 %1001
        %v1003 = vadd.f32 %v949, %v951
        %1004 = vadd.xlane.f32.xlu0 %v1003
        %v1005 = vpop.xlane.xlu0 %1004
        %v1006 = vadd.f32 %v953, %v955
        %1007 = vadd.xlane.f32.xlu0 %v1006
        %v1008 = vpop.xlane.xlu0 %1007
        %v1009 = vadd.f32 %v957, %v959
        %1010 = vadd.xlane.f32.xlu0 %v1009
        %v1011 = vpop.xlane.xlu0 %1010
        %v1012 = vadd.f32 %v961, %v963
        %1013 = vadd.xlane.f32.xlu0 %v1012
        %v1014 = vpop.xlane.xlu0 %1013
        %v1015 = vadd.f32 %v965, %v967
        %1016 = vadd.xlane.f32.xlu0 %v1015
        %v1017 = vpop.xlane.xlu0 %1016
        %v1018 = vadd.f32 %v969, %v971
        %1019 = vadd.xlane.f32.xlu0 %v1018
        %v1020 = vpop.xlane.xlu0 %1019
        %v1021 = vadd.f32 %v973, %v975
        %1022 = vadd.xlane.f32.xlu0 %v1021
        %v1023 = vpop.xlane.xlu0 %1022
        %v1024 = vrcp.pop %v978
        %v1025 = vrcp.pop %v981
        %v1026 = vrcp.pop %v984
        %v1027 = vrcp.pop %v987
        %v1028 = vrcp.pop %v990
        %v1029 = vrcp.pop %v993
        %v1030 = vrcp.pop %v996
        %v1031 = vrcp.pop %v999
        %v1032 = vrcp.pop %v1002
        %v1033 = vrcp.pop %v1005
        %v1034 = vrcp.pop %v1008
        %v1035 = vrcp.pop %v1011
        %v1036 = vrcp.pop %v1014
        %v1037 = vrcp.pop %v1017
        %v1038 = vrcp.pop %v1020
        %v1039 = vrcp.pop %v1023
        %v1040 = vmul.f32 %v913, %v1024
        %v1041 = vmul.f32 %v915, %v1024
        %v1042 = vmul.f32 %v917, %v1025
        %v1043 = vmul.f32 %v919, %v1025
        %v1044 = vmul.f32 %v921, %v1026
        %v1045 = vmul.f32 %v923, %v1026
        %v1046 = vmul.f32 %v925, %v1027
        %v1047 = vmul.f32 %v927, %v1027
        %v1048 = vmul.f32 %v929, %v1028
        %v1049 = vmul.f32 %v931, %v1028
        %v1050 = vmul.f32 %v933, %v1029
        %v1051 = vmul.f32 %v935, %v1029
        %v1052 = vmul.f32 %v937, %v1030
        %v1053 = vmul.f32 %v939, %v1030
        %v1054 = vmul.f32 %v941, %v1031
        %v1055 = vmul.f32 %v943, %v1031
        %v1056 = vmul.f32 %v945, %v1032
        %v1057 = vmul.f32 %v947, %v1032
        %v1058 = vmul.f32 %v949, %v1033
        %v1059 = vmul.f32 %v951, %v1033
        %v1060 = vmul.f32 %v953, %v1034
        %v1061 = vmul.f32 %v955, %v1034
        %v1062 = vmul.f32 %v957, %v1035
        %v1063 = vmul.f32 %v959, %v1035
        %v1064 = vmul.f32 %v961, %v1036
        %v1065 = vmul.f32 %v963, %v1036
        %v1066 = vmul.f32 %v965, %v1037
        %v1067 = vmul.f32 %v967, %v1037
        %v1068 = vmul.f32 %v969, %v1038
        %v1069 = vmul.f32 %v971, %v1038
        %v1070 = vmul.f32 %v973, %v1039
        %v1071 = vmul.f32 %v975, %v1039
        %v1072 = vpack.c.bf16 %v1042, %v1040
        %v1073 = vpack.c.bf16 %v1043, %v1041
        %v1074 = vpack.c.bf16 %v1046, %v1044
        %v1075 = vpack.c.bf16 %v1047, %v1045
        %v1076 = vpack.c.bf16 %v1050, %v1048
        %v1077 = vpack.c.bf16 %v1051, %v1049
        %v1078 = vpack.c.bf16 %v1054, %v1052
        %v1079 = vpack.c.bf16 %v1055, %v1053
        %v1080 = vpack.c.bf16 %v1058, %v1056
        %v1081 = vpack.c.bf16 %v1059, %v1057
        %v1082 = vpack.c.bf16 %v1062, %v1060
        %v1083 = vpack.c.bf16 %v1063, %v1061
        %v1084 = vpack.c.bf16 %v1066, %v1064
        %v1085 = vpack.c.bf16 %v1067, %v1065
        %v1086 = vpack.c.bf16 %v1070, %v1068
        %v1087 = vpack.c.bf16 %v1071, %v1069
        %v1088 = vld [vmem:[#allocation3] sm:$0xff]
        %v1089 = vld [vmem:[#allocation3 + $0x8] sm:$0xff]
        %v1090 = vld [vmem:[#allocation3 + $0x10] sm:$0xff]
        %v1091 = vld [vmem:[#allocation3 + $0x18] sm:$0xff]
        %v1092 = vld [vmem:[#allocation3 + $0x20] sm:$0xff]
        %v1093 = vld [vmem:[#allocation3 + $0x28] sm:$0xff]
        %v1094 = vld [vmem:[#allocation3 + $0x30] sm:$0xff]
        %v1095 = vld [vmem:[#allocation3 + $0x38] sm:$0xff]
        %v1104 = vunpack.c.l.b16 %v1088
        %v1105 = vunpack.c.h.b16 %v1088
        %v1106 = vunpack.c.l.b16 %v1089
        %v1107 = vunpack.c.h.b16 %v1089
        %v1108 = vunpack.c.l.b16 %v1090
        %v1109 = vunpack.c.h.b16 %v1090
        %v1110 = vunpack.c.l.b16 %v1091
        %v1111 = vunpack.c.h.b16 %v1091
        %v1112 = vunpack.c.l.b16 %v1092
        %v1113 = vunpack.c.h.b16 %v1092
        %v1114 = vunpack.c.l.b16 %v1093
        %v1115 = vunpack.c.h.b16 %v1093
        %v1116 = vunpack.c.l.b16 %v1094
        %v1117 = vunpack.c.h.b16 %v1094
        %v1118 = vunpack.c.l.b16 %v1095
        %v1119 = vunpack.c.h.b16 %v1095
        %v1120 = vpack.c.b16 %v1106, %v1104
        %v1121 = vpack.c.b16 %v1107, %v1105
        %v1122 = vpack.c.b16 %v1110, %v1108
        %v1123 = vpack.c.b16 %v1111, %v1109
        %v1124 = vpack.c.b16 %v1114, %v1112
        %v1125 = vpack.c.b16 %v1115, %v1113
        %v1126 = vpack.c.b16 %v1118, %v1116
        %v1127 = vpack.c.b16 %v1119, %v1117
        %1136 = vmatpush.bf16.xpose.msra.mxu0 %v1086
        %1137 = vmatpush.bf16.xpose.msra.mxu0 %v1084
        %1138 = vmatpush.bf16.xpose.msra.mxu0 %v1082
        %1139 = vmatpush.bf16.xpose.msra.mxu0 %v1080
        %1140 = vmatpush.bf16.xpose.msra.mxu0 %v1078
        %1141 = vmatpush.bf16.xpose.msra.mxu0 %v1076
        %1142 = vmatpush.bf16.xpose.msra.mxu0 %v1074
        %1143 = vmatpush.bf16.xpose.msra.mxu0 %v1072
        %1144 = vmatmul.bf16.gmra.mxu0 %v1120
        %v1145 = vpop.f32.mrf.mxu0
        %v1146 = vadd.f32 0.0, %v1145
        %v1147 = vpop.f32.mrf.mxu0
        %v1148 = vadd.f32 0.0, %v1147
        %1149 = vmatmul.bf16.gmra.mxu0 %v1122
        %v1150 = vpop.f32.mrf.mxu0
        %v1151 = vadd.f32 0.0, %v1150
        %v1152 = vpop.f32.mrf.mxu0
        %v1153 = vadd.f32 0.0, %v1152
        %1154 = vmatmul.bf16.gmra.mxu0 %v1124
        %v1155 = vpop.f32.mrf.mxu0
        %v1156 = vadd.f32 0.0, %v1155
        %v1157 = vpop.f32.mrf.mxu0
        %v1158 = vadd.f32 0.0, %v1157
        %1159 = vmatmul.bf16.gmra.mxu0 %v1126
        %v1160 = vpop.f32.mrf.mxu0
        %v1161 = vadd.f32 0.0, %v1160
        %v1162 = vpop.f32.mrf.mxu0
        %v1163 = vadd.f32 0.0, %v1162
        %1164 = vdwg.mxu0
        %1165 = vmatpush.bf16.xpose.msra.mxu0 %v1087
        %1166 = vmatpush.bf16.xpose.msra.mxu0 %v1085
        %1167 = vmatpush.bf16.xpose.msra.mxu0 %v1083
        %1168 = vmatpush.bf16.xpose.msra.mxu0 %v1081
        %1169 = vmatpush.bf16.xpose.msra.mxu0 %v1079
        %1170 = vmatpush.bf16.xpose.msra.mxu0 %v1077
        %1171 = vmatpush.bf16.xpose.msra.mxu0 %v1075
        %1172 = vmatpush.bf16.xpose.msra.mxu0 %v1073
        %1173 = vmatmul.bf16.gmra.mxu0 %v1121
        %v1174 = vpop.f32.mrf.mxu0
        %v1175 = vadd.f32 %v1146, %v1174
        %v1176 = vpop.f32.mrf.mxu0
        %v1177 = vadd.f32 %v1148, %v1176
        %1178 = vmatmul.bf16.gmra.mxu0 %v1123
        %v1179 = vpop.f32.mrf.mxu0
        %v1180 = vadd.f32 %v1151, %v1179
        %v1181 = vpop.f32.mrf.mxu0
        %v1182 = vadd.f32 %v1153, %v1181
        %1183 = vmatmul.bf16.gmra.mxu0 %v1125
        %v1184 = vpop.f32.mrf.mxu0
        %v1185 = vadd.f32 %v1156, %v1184
        %v1186 = vpop.f32.mrf.mxu0
        %v1187 = vadd.f32 %v1158, %v1186
        %1188 = vmatmul.bf16.gmra.mxu0 %v1127
        %v1189 = vpop.f32.mrf.mxu0
        %v1190 = vadd.f32 %v1161, %v1189
        %v1191 = vpop.f32.mrf.mxu0
        %v1192 = vadd.f32 %v1163, %v1191
        %1193 = vdwg.mxu0
        %s1194 = sld [smem:[#allocation4]]
        %v1195 = vstv %s1194
        %v1196 = vmul.f32 %v1195, %v1175
        %v1197 = vmul.f32 %v1195, %v1177
        %v1198 = vmul.f32 %v1195, %v1180
        %v1199 = vmul.f32 %v1195, %v1182
        %v1200 = vmul.f32 %v1195, %v1185
        %v1201 = vmul.f32 %v1195, %v1187
        %v1202 = vmul.f32 %v1195, %v1190
        %v1203 = vmul.f32 %v1195, %v1192
        %v1204 = vadd.f32 %v1196, %v643
        %v1205 = vadd.f32 %v1197, %v644
        %v1206 = vadd.f32 %v1198, %v645
        %v1207 = vadd.f32 %v1199, %v646
        %v1208 = vadd.f32 %v1200, %v647
        %v1209 = vadd.f32 %v1201, %v648
        %v1210 = vadd.f32 %v1202, %v649
        %v1211 = vadd.f32 %v1203, %v650
        %1212 = vst [vmem:[%s412] sm:$0xff] %v1204
        %1213 = vst [vmem:[%s412 + $0x8] sm:$0xff] %v1205
        %1214 = vst [vmem:[%s412 + $0x10] sm:$0xff] %v1206
        %1215 = vst [vmem:[%s412 + $0x18] sm:$0xff] %v1207
        %1216 = vst [vmem:[%s412 + $0x20] sm:$0xff] %v1208
        %1217 = vst [vmem:[%s412 + $0x28] sm:$0xff] %v1209
        %1218 = vst [vmem:[%s412 + $0x30] sm:$0xff] %v1210
        %1219 = vst [vmem:[%s412 + $0x38] sm:$0xff] %v1211
        %s1220 = sand.u32 %s253, 1
        %s1221 = scalar_lea.sflag [#allocation7], %s1220
        %s1222 = sand.u32 %s253, 1
        %s1223 = smul.addr %s1222, 64
        %s1224 = scalar_lea.vmem [#allocation10], %s1223
        // Predicated region
        $region69: #{tpu_custom_call.1} parent=55 // pred_check
          %p1225 = pneg %p263
        $region70: #{tpu_custom_call.1} parent=55 // pred_check_branch
          %1227 = sbr.rel (%p1225) target = $region72
        $region71: #{tpu_custom_call.1} parent=55 // pred_region
          %1229 = vsyncadd %s1221, 0
          %s1230 = smul.addr %s34, 16
          %s1231 = sadd.s32 %s35, %s1230
          %s1232 = smul.addr %s1231, 8
          %s1233 = scalar_lea.hbm %s9, %s1232
          %s1234 = sshll.u32 %s1224, 4
          %s1235 = int_to_ptr.vmem [resolvable:$true] %s1234
          %s1236 = sshll.u32 %s1233, 4
          %s1237 = int_to_ptr.hbm [resolvable:$true] %s1236
          %1242 = dma.vmem_to_hbm [thread:$0]  %s1235, 1024, %s1237, %s1221, 128, 256, 8
        $region72: #{tpu_custom_call.1} parent=55 // pred_fallthru
          _
      $region56: #{tpu_custom_call.1} parent=5 // pred_fallthru
        _
      %p1243 = scmp.le.s32.totalorder 2, %s25
      // Predicated region
      $region73: #{tpu_custom_call.1} parent=5 // pred_check
        %p1244 = pneg %p1243
      $region74: #{tpu_custom_call.1} parent=5 // pred_check_branch
        %1246 = sbr.rel (%p1244) target = $region76
      $region75: #{tpu_custom_call.1} parent=5 // pred_region
        %s1247 = ssub.s32 %s25, 2
        // Predicated region
        $region77: #{tpu_custom_call.1} parent=75 // pred_check
          %p1248 = pneg %p269
        $region78: #{tpu_custom_call.1} parent=75 // pred_check_branch
          %1250 = sbr.rel (%p1248) target = $region80
        $region79: #{tpu_custom_call.1} parent=75 // pred_region
          %s1251 = sand.u32 %s254, 1
          %s1252 = scalar_lea.sflag [#allocation7], %s1251
          %s1253 = sand.u32 %s254, 1
          %s1254 = smul.addr %s1253, 64
          %s1255 = scalar_lea.vmem [#allocation10], %s1254
          %1257 = dma.done %s1252, 1024
        $region80: #{tpu_custom_call.1} parent=75 // pred_fallthru
          _
      $region76: #{tpu_custom_call.1} parent=5 // pred_fallthru
        _
    $region6: #{tpu_custom_call.1} parent=1 // loop_footer
      %s29 = sadd.s32 1, %s25
    $region7: #{tpu_custom_call.1} parent=1 // loop_footer_branch
      %24 = sbr.rel target = $region3
    $region8: #{tpu_custom_call.1} parent=1 // loop_exit
      _
    %1258 = vsyncpa [#allocation6], 1
    %s1259 = scalar_lea.sflag [#allocation6], 1
    %1260 = vsyncpa %s1259, 1
    %1261 = vsyncpa [#allocation9], 1
    %s1262 = scalar_lea.sflag [#allocation9], 1
    %1263 = vsyncpa %s1262, 1
    %1264 = vsyncpa [#allocation7], 1
    %s1265 = scalar_lea.sflag [#allocation7], 1
    %1266 = vsyncpa %s1265, 1

</llo_original>
